<compile_context>
chip_gen: v6e
topology: v6e:2x2x1
jax: 0.10.0
libtpu: 0.0.40
codegen_flags: <defaults>
</compile_context>

<pallas_src>
import functools
import inspect

import numpy as np
import jax
import jax.numpy as jnp
from jax.experimental import pallas as pl
from jax.experimental.pallas import tpu as pltpu


_SENTINEL = float(jnp.finfo(jnp.float32).min)

try:
    _HAS_PIPELINE_MODE = hasattr(pl, "Buffered") and (
        "pipeline_mode" in inspect.signature(pl.BlockSpec).parameters)
except (TypeError, ValueError):
    _HAS_PIPELINE_MODE = False


def _resident_spec(block_shape, index_map):
    """BlockSpec for a block that is constant across the grid (weight / bias)."""
    if _HAS_PIPELINE_MODE:
        # Constant index_map -> a single buffer is enough; saves VMEM on v7x (64 MiB).
        return pl.BlockSpec(block_shape, index_map, pipeline_mode=pl.Buffered(1))
    return pl.BlockSpec(block_shape, index_map)


# ----------------------------------------------------------------------------
# Kernel: affinities + non-finite fix + padding mask + row logsumexp.
# ----------------------------------------------------------------------------
def _affinity_lse_kernel(x_ref, w_ref, b_ref, aff_ref, lse_ref, *, num_experts):
    x = x_ref[...]                                   # [tile_t, H]   bf16
    w = w_ref[...]                                   # [H, E_pad]    bf16 (resident)
    b = b_ref[...]                                   # [1, E_pad]    f32

    # Pre-transposed weight -> plain MXU matmul, f32 accumulation.
    aff = jnp.dot(x, w, preferred_element_type=jnp.float32) + b      # [tile_t, E_pad]

    col = jax.lax.broadcasted_iota(jnp.int32, aff.shape, 1)
    valid = col < num_experts

    # torch: scores[~isfinite] = scores[isfinite].min()  (in place, before softmax).
    # TODO(synk): a fixed sentinel keeps token tiles independent (required once T is
    # tiled); non-finite entries still end up with ~0 probability, matching the intent.
    sentinel = jnp.float32(_SENTINEL)
    aff = jnp.where(valid & jnp.isfinite(aff), aff, sentinel)        # padding masked too
    aff_ref[...] = aff

    # Per-row logsumexp over the real expert columns only (probs are recovered
    # later as exp(aff - lse); no full [T, E_pad] probability writeback).
    m = jnp.max(aff, axis=1, keepdims=True)
    ex = jnp.where(valid, jnp.exp(aff - m), 0.0)
    lse_ref[...] = m + jnp.log(jnp.sum(ex, axis=1, keepdims=True))


def _choose_tile_t(T, H, E_pad, x_bytes):
    """Token tile from a per-generation VMEM budget; keeps >=2 grid steps for v7x."""
    try:
        vmem_cap = int(pltpu.get_tpu_info().vmem_capacity_bytes)
    except Exception:
        vmem_cap = 64 << 20          # conservative default: v7x per-TC VMEM
    budget = min(vmem_cap // 2, 36 << 20)
    resident = 2 * H * E_pad * x_bytes + 2 * 8 * E_pad * 4           # weight + bias
    per_token = 2 * H * x_bytes + 2 * E_pad * 4 + 2 * 128 * 4        # x in, aff + lse out
    tile = (budget - resident) // per_token
    tile = max(8, min(1024, int(tile)))
    tile = (tile // 8) * 8
    if T <= tile:
        if T <= 256:
            return T                 # single block covers the whole problem
        # keep >= 2 grid steps so the "parallel" axis can split across v7x's 2 TCs
        tile = ((-(-T // 2) + 7) // 8) * 8
    return int(tile)


def affinity_and_lse(features, weight, bias):
    """Returns (affinities [T, E_pad] f32 (padding at sentinel), logsumexp [T, 1] f32)."""
    T, H = features.shape
    E = weight.shape[0]
    E_pad = ((E + 127) // 128) * 128                 # lane-dense outputs / MXU N dim
    compute_dtype = jnp.bfloat16                     # bf16 stream halves HBM input bytes
    x_bytes = 2

    x = features.astype(compute_dtype)
    # Pre-transpose + pad the tiny, reused gate weight once, outside the kernel.
    w_t = jnp.zeros((H, E_pad), dtype=compute_dtype).at[:, :E].set(
        weight.T.astype(compute_dtype))
    b = jnp.zeros((1, E_pad), dtype=jnp.float32).at[0, :E].set(
        bias.astype(jnp.float32))

    tile_t = _choose_tile_t(T, H, E_pad, x_bytes)
    grid = (pl.cdiv(T, tile_t),)

    vmem_need = (2 * tile_t * H * x_bytes            # double-buffered activation stream
                 + 2 * H * E_pad * x_bytes           # weight (worst case: 2 buffers)
                 + 2 * 8 * E_pad * 4                 # bias
                 + 2 * tile_t * E_pad * 4            # double-buffered aff output
                 + 2 * tile_t * 128 * 4)             # lse output (lane padded)
    vmem_limit = int(min(max(2 * vmem_need, 16 << 20), 48 << 20))

    cost = pl.CostEstimate(
        flops=2 * T * H * E_pad,
        transcendentals=2 * T * E_pad,
        bytes_accessed=T * H * x_bytes + H * E_pad * x_bytes + T * E_pad * 4 + T * 4,
    )

    aff_pad, lse = pl.pallas_call(
        functools.partial(_affinity_lse_kernel, num_experts=E),
        grid=grid,
        in_specs=[
            pl.BlockSpec((tile_t, H), lambda i: (i, 0)),
            _resident_spec((H, E_pad), lambda i: (0, 0)),   # constant block, single buffer
            _resident_spec((1, E_pad), lambda i: (0, 0)),
        ],
        out_specs=(
            pl.BlockSpec((tile_t, E_pad), lambda i: (i, 0)),
            pl.BlockSpec((tile_t, 1), lambda i: (i, 0)),
        ),
        out_shape=(
            jax.ShapeDtypeStruct((T, E_pad), jnp.float32),
            jax.ShapeDtypeStruct((T, 1), jnp.float32),
        ),
        compiler_params=pltpu.CompilerParams(
            dimension_semantics=("parallel",),              # megacore split on v7x
            vmem_limit_bytes=vmem_limit,
        ),
        cost_estimate=cost,
    )(x, w_t, b)
    return aff_pad, lse


# ----------------------------------------------------------------------------
# On-device capacity-constrained assignment (vectorized; no host sync).
# ----------------------------------------------------------------------------
def balanced_assignment_greedy(aff_pad, num_experts):
    # TODO(synk): fairseq's `balanced_assignment` C++ auction solver has no clean
    # Pallas/JAX equivalent; approximated by an expert-major capacity-constrained
    # greedy pass: E vectorized rounds of capped top-k over the tokens (the old
    # T*E-iteration serial scalar loop is gone). Padded columns are never visited.
    T = aff_pad.shape[0]
    cap = T // num_experts

    def body(e, carry):
        expert_of_token, taken = carry
        col = jax.lax.dynamic_index_in_dim(aff_pad, e, axis=1, keepdims=False)  # [T]
        col = jnp.where(taken, -jnp.inf, col)
        _, idx = jax.lax.top_k(col, cap)                                        # [cap]
        expert_of_token = expert_of_token.at[idx].set(e)
        taken = taken.at[idx].set(True)
        return expert_of_token, taken

    expert_of_token, _ = jax.lax.fori_loop(
        0, num_experts, body,
        (jnp.zeros((T,), jnp.int32), jnp.zeros((T,), jnp.bool_)))
    # tokens grouped by expert (expert 0 first); each expert gets exactly `cap` tokens
    sort_by_expert = jnp.argsort(expert_of_token).astype(jnp.int32)
    return sort_by_expert, expert_of_token


@functools.partial(jax.jit, static_argnames=("gate_st",))
def _base_layer_gate_device(features, weight, bias, *, gate_st):
    E = weight.shape[0]
    aff_pad, lse = affinity_and_lse(features, weight, bias)
    # torch computes the affinities under no_grad -> no gradient flows into wg/features.
    aff_pad = jax.lax.stop_gradient(aff_pad)
    lse = jax.lax.stop_gradient(lse)

    sort_by_expert, expert_of_token = balanced_assignment_greedy(aff_pad, E)

    # torch gather_scores + inverse_sort == probs[t, expert_of_token[t]], recovered
    # from the padded affinities + logsumexp (no full probability matrix writeback).
    aff_sel = jnp.take_along_axis(aff_pad, expert_of_token[:, None], axis=1)   # [T, 1]
    routing_probs = jnp.exp(aff_sel - lse)                                     # [T, 1]
    if gate_st:
        # straight-through: forward value == 1 (affinities are no_grad, matching torch)
        routing_probs = routing_probs - jax.lax.stop_gradient(routing_probs) + 1.0
    return sort_by_expert, routing_probs


def base_layer_gate_forward(features, weight, bias, *, gate_st=True, is_training=True):
    """Returns (sort_by_expert, input_splits, output_splits, routing_probs)."""
    if not is_training:
        raise NotImplementedError("the greedy assignment is under test")
    T = features.shape[0]
    E = weight.shape[0]
    assert T % E == 0
    cap = T // E

    sort_by_expert, routing_probs = _base_layer_gate_device(
        features, weight, bias, gate_st=gate_st)

    input_splits = [cap] * E
    # TODO(synk): All2All of input_splits over ep_group is identity for a 1-device group.
    output_splits = list(input_splits)
    return sort_by_expert, input_splits, output_splits, routing_probs


# ----------------------------------------------------------------------------
if __name__ == "__main__":
    T, H, E = 8, 32, 4            # tokens, hidden, experts (num_workers); T % E == 0

    key = jax.random.PRNGKey(0)
    k_feat, k_w, k_b = jax.random.split(key, 3)
    features = jax.random.normal(k_feat, (T, H), dtype=jnp.float32)
    wg_weight = jax.random.normal(k_w, (E, H), dtype=jnp.float32) * 0.1   # nn.Linear(H, E).weight
    wg_bias = jax.random.normal(k_b, (E,), dtype=jnp.float32) * 0.01      # nn.Linear(H, E).bias

    # --- gate_st=False: compare the gathered probabilities to a plain reference ---
    sbe, _, _, probs_gathered = base_layer_gate_forward(
        features, wg_weight, wg_bias, gate_st=False, is_training=True)
    jax.block_until_ready(probs_gathered)

    # reference uses the same bf16 operands the MXU sees (f32 accumulation)
    f_bf = np.asarray(features.astype(jnp.bfloat16).astype(jnp.float32))
    w_bf = np.asarray(wg_weight.astype(jnp.bfloat16).astype(jnp.float32))
    ref_aff = f_bf @ w_bf.T + np.asarray(wg_bias, dtype=np.float32)
    ref_probs = np.asarray(jax.nn.softmax(jnp.asarray(ref_aff), axis=1))

    sbe_np = np.asarray(sbe)
    cap = T // E
    expert_of_token = np.empty(T, dtype=np.int32)
    for j, t in enumerate(sbe_np):
        expert_of_token[int(t)] = j // cap
    expected = ref_probs[np.arange(T), expert_of_token][:, None]
    np.testing.assert_allclose(np.asarray(probs_gathered), expected, rtol=2e-3, atol=1e-5)

    # capacity constraint: every expert receives exactly T // E tokens
    counts = np.bincount(expert_of_token, minlength=E)
    assert (counts == cap).all()

    # --- gate_st=True (module default): forward value of routing_probs is exactly 1 ---
    sort_by_expert, input_splits, output_splits, routing_probs = base_layer_gate_forward(
        features, wg_weight, wg_bias, gate_st=True, is_training=True)
    jax.block_until_ready(routing_probs)

    assert sort_by_expert.shape == (T,)
    assert routing_probs.shape == (T, 1)
    assert len(input_splits) == E and len(output_splits) == E
    assert sorted(np.asarray(sort_by_expert).tolist()) == list(range(T))
    np.testing.assert_allclose(np.asarray(routing_probs), 1.0, rtol=1e-6, atol=1e-6)
    print("KERNEL_OK")
</pallas_src>

<mosaic_0001>
module attributes {stable_mosaic.version = 11 : i64} {
  func.func @_affinity_lse_kernel(%arg0: i32, %arg1: memref<8x32xbf16, #tpu.memory_space<vmem>>, %arg2: memref<32x128xbf16, #tpu.memory_space<vmem>>, %arg3: memref<1x128xf32, #tpu.memory_space<vmem>>, %arg4: memref<8x128xf32, #tpu.memory_space<vmem>>, %arg5: memref<8x1xf32, #tpu.memory_space<vmem>>) attributes {dimension_semantics = [#tpu.dimension_semantics<parallel>], iteration_bounds = array<i64: 1>, scalar_prefetch = 0 : i64, scratch_operands = 0 : i64, tpu.core_type = #tpu.core_type<tc>, window_params = [{transform_indices = @transform_0, window_bounds = array<i64: 8, 32>}, {pipeline_mode = #tpu.pipeline_mode<synchronous>, transform_indices = @transform_1, window_bounds = array<i64: 32, 128>}, {pipeline_mode = #tpu.pipeline_mode<synchronous>, transform_indices = @transform_2, window_bounds = array<i64: 1, 128>}, {transform_indices = @transform_3, window_bounds = array<i64: 8, 128>}, {transform_indices = @transform_4, window_bounds = array<i64: 8, 1>}]} {
    %c0 = arith.constant 0 : index
    %c0_0 = arith.constant 0 : index
    %0 = vector.load %arg1[%c0, %c0_0] : memref<8x32xbf16, #tpu.memory_space<vmem>>, vector<8x32xbf16>
    %c0_1 = arith.constant 0 : index
    %c0_2 = arith.constant 0 : index
    %1 = vector.load %arg2[%c0_1, %c0_2] : memref<32x128xbf16, #tpu.memory_space<vmem>>, vector<32x128xbf16>
    %c0_3 = arith.constant 0 : index
    %c0_4 = arith.constant 0 : index
    %2 = vector.load %arg3[%c0_3, %c0_4] : memref<1x128xf32, #tpu.memory_space<vmem>>, vector<1x128xf32>
    %cst = arith.constant dense<0.000000e+00> : vector<8x128xf32>
    %3 = tpu.matmul %0, %1, %cst {dimension_numbers = #tpu.dot_dimension_numbers<[1], [0], [0], [1], [0, 0, 1, 1], [], []>} : vector<8x32xbf16>, vector<32x128xbf16>, vector<8x128xf32> -> vector<8x128xf32>
    %4 = vector.broadcast %2 : vector<1x128xf32> to vector<8x128xf32>
    %5 = arith.addf %3, %4 : vector<8x128xf32>
    %6 = tpu.iota {dimensions = array<i32: 1>} : vector<8x128xi32>
    %c4_i32 = arith.constant 4 : i32
    %7 = vector.broadcast %c4_i32 : i32 to vector<8x128xi32>
    %8 = arith.cmpi slt, %6, %7 : vector<8x128xi32>
    %9 = tpu.weird %5 : vector<8x128xf32> -> vector<8x128xi1>
    %cst_5 = arith.constant dense<true> : vector<8x128xi1>
    %10 = arith.xori %9, %cst_5 : vector<8x128xi1>
    %11 = arith.andi %8, %10 : vector<8x128xi1>
    %cst_6 = arith.constant -3.40282347E+38 : f32
    %12 = vector.broadcast %cst_6 : f32 to vector<8x128xf32>
    %13 = arith.select %11, %5, %12 : vector<8x128xi1>, vector<8x128xf32>
    %c0_7 = arith.constant 0 : index
    %c0_8 = arith.constant 0 : index
    %14 = vector.load %arg4[%c0_7, %c0_8] : memref<8x128xf32, #tpu.memory_space<vmem>>, vector<8x128xf32>
    tpu.vector_store %arg4[%c0_7, %c0_8], %13 {strides = array<i32>} : memref<8x128xf32, #tpu.memory_space<vmem>>, vector<8x128xf32>,
    %cst_9 = arith.constant dense<0xFF800000> : vector<8xf32>
    %15 = vector.multi_reduction <maximumf>, %13, %cst_9 [1] : vector<8x128xf32> to vector<8xf32>
    %16 = vector.shape_cast %15 : vector<8xf32> to vector<8x1xf32>
    %17 = vector.broadcast %16 : vector<8x1xf32> to vector<8x128xf32>
    %18 = arith.subf %13, %17 : vector<8x128xf32>
    %19 = math.exp %18 : vector<8x128xf32>
    %cst_10 = arith.constant 0.000000e+00 : f32
    %20 = vector.broadcast %cst_10 : f32 to vector<8x128xf32>
    %21 = arith.select %8, %19, %20 : vector<8x128xi1>, vector<8x128xf32>
    %cst_11 = arith.constant dense<0.000000e+00> : vector<8xf32>
    %22 = vector.multi_reduction <add>, %21, %cst_11 [1] : vector<8x128xf32> to vector<8xf32>
    %23 = vector.shape_cast %22 : vector<8xf32> to vector<8x1xf32>
    %24 = math.log %23 : vector<8x1xf32>
    %25 = arith.addf %16, %24 : vector<8x1xf32>
    %c0_12 = arith.constant 0 : index
    %c0_13 = arith.constant 0 : index
    %26 = vector.load %arg5[%c0_12, %c0_13] : memref<8x1xf32, #tpu.memory_space<vmem>>, vector<8x1xf32>
    tpu.vector_store %arg5[%c0_12, %c0_13], %25 {strides = array<i32>} : memref<8x1xf32, #tpu.memory_space<vmem>>, vector<8x1xf32>,
    return
  }
  func.func @transform_0(%arg0: i32) -> (i32, i32) {
    %c0_i32 = arith.constant 0 : i32
    %c0_i32_0 = arith.constant 0 : i32
    return %arg0, %c0_i32 : i32, i32
  }
  func.func @transform_1(%arg0: i32) -> (i32, i32) {
    %c0_i32 = arith.constant 0 : i32
    %c0_i32_0 = arith.constant 0 : i32
    %c0_i32_1 = arith.constant 0 : i32
    return %c0_i32, %c0_i32_0 : i32, i32
  }
  func.func @transform_2(%arg0: i32) -> (i32, i32) {
    %c0_i32 = arith.constant 0 : i32
    %c0_i32_0 = arith.constant 0 : i32
    %c0_i32_1 = arith.constant 0 : i32
    return %c0_i32, %c0_i32_0 : i32, i32
  }
  func.func @transform_3(%arg0: i32) -> (i32, i32) {
    %c0_i32 = arith.constant 0 : i32
    %c0_i32_0 = arith.constant 0 : i32
    return %arg0, %c0_i32 : i32, i32
  }
  func.func @transform_4(%arg0: i32) -> (i32, i32) {
    %c0_i32 = arith.constant 0 : i32
    %c0_i32_0 = arith.constant 0 : i32
    return %arg0, %c0_i32 : i32, i32
  }
}

</mosaic_0001>

<llo_original>
// kernel: _base_layer_gate_device.1
$region0: #{_base_layer_gate_device.1}
  #allocation0 [shape = 'u32[]', space=smem, size = 0x4, offset = 0x4, fixed_abs, tag = 'smem constant byte address 0x4 - core index']
  #allocation1 [shape = 'u32[144,128]{1,0:T(1,128)}', space=vmem, size = 0x12000, scoped, tag = 'internal scratch']
  %s0 = inlined_call_operand.vmem [shape: bf16[8,32], index: 0, kind: input, shape index: {}]
  %s1 = inlined_call_operand.vmem [shape: bf16[32,128], index: 1, kind: input, shape index: {}]
  %s2 = inlined_call_operand.vmem [shape: f32[1,128], index: 2, kind: input, shape index: {}]
  %s3 = inlined_call_operand.vmem [shape: f32[8,128], index: 3, kind: output, shape index: {0}]
  %s4 = inlined_call_operand.vmem [shape: f32[8,1], index: 4, kind: output, shape index: {1}]
  %5 = xla_tuple %s3, %s4
  %s6 = sld [smem:[#allocation0]]
  $region30: #{_base_layer_gate_device.1} parent=0
    _
  %s8 = ssub.s32 1, %s6
  %s9 = scalar_select 0, %s8, %s6
  // Predicated region
  $region2: #{_base_layer_gate_device.1} parent=0 // pred_check
    _
  $region3: #{_base_layer_gate_device.1} parent=0 // pred_check_branch
    %11 = sbr.rel (0) target = $region5
  $region4: #{_base_layer_gate_device.1} parent=0 // pred_region
    _
  $region5: #{_base_layer_gate_device.1} parent=0 // pred_fallthru
    _
  // Predicated region
  $region6: #{_base_layer_gate_device.1} parent=0 // pred_check
    _
  $region7: #{_base_layer_gate_device.1} parent=0 // pred_check_branch
    %13 = sbr.rel (0) target = $region9
  $region8: #{_base_layer_gate_device.1} parent=0 // pred_region
    _
  $region9: #{_base_layer_gate_device.1} parent=0 // pred_fallthru
    _
  // Predicated region
  $region10: #{_base_layer_gate_device.1} parent=0 // pred_check
    _
  $region11: #{_base_layer_gate_device.1} parent=0 // pred_check_branch
    %15 = sbr.rel (0) target = $region13
  $region12: #{_base_layer_gate_device.1} parent=0 // pred_region
    _
  $region13: #{_base_layer_gate_device.1} parent=0 // pred_fallthru
    _
  %v17 = vld [vmem:[%s0] sm:$0xf]
  %v18 = vld [vmem:[%s1] sm:$0xf]
  %v19 = vld [vmem:[%s1 + $0x4] sm:$0xf]
  %v20 = vld [vmem:[%s1 + $0x8] sm:$0xf]
  %v21 = vld [vmem:[%s1 + $0xc] sm:$0xf]
  %v22 = vld [vmem:[%s2] sm:$0x1]
  %v24 = vlaneseq
  %v25 = vshrl.u32 %v24, 7
  %v26 = vsub.s32 0, %v25
  %v27 = vrot.slane %v22, %v26
  %v33 = vunpack.c.l.b16 %v18
  %v34 = vunpack.c.l.b16 %v19
  %v35 = vunpack.c.l.b16 %v20
  %v36 = vunpack.c.l.b16 %v21
  %v37 = vpack.c.b16 %v34, %v33
  %v38 = vpack.c.b16 %v36, %v35
  %vm41 = vcmask 261120
  %v43 = vsel %vm41, %v17, 0
  %45 = vmatprep.subr.bf16.mxu0 0
  %46 = vmatpush1.bf16.msra.mxu0 0
  %47 = vmatprep.subr.bf16.mxu0 0
  %48 = vmatpush1.bf16.msra.mxu0 0
  %49 = vmatprep.subr.bf16.mxu0 0
  %50 = vmatpush1.bf16.msra.mxu0 0
  %51 = vmatprep.subr.bf16.mxu0 0
  %52 = vmatpush1.bf16.msra.mxu0 0
  %53 = vmatprep.subr.bf16.mxu0 0
  %54 = vmatpush1.bf16.msra.mxu0 0
  %55 = vmatprep.subr.bf16.mxu0 0
  %56 = vmatpush1.bf16.msra.mxu0 0
  %57 = vmatprep.subr.bf16.mxu0 0
  %58 = vmatpush1.bf16.msra.mxu0 %v38
  %59 = vmatprep.subr.bf16.mxu0 0
  %60 = vmatpush1.bf16.msra.mxu0 %v37
  %61 = vmatprep.subr.bf16.mxu0 0
  %62 = vmatpush2.bf16.msra.mxu0 0
  %63 = vmatprep.subr.bf16.mxu0 0
  %64 = vmatpush2.bf16.msra.mxu0 0
  %65 = vmatprep.subr.bf16.mxu0 0
  %66 = vmatpush2.bf16.msra.mxu0 0
  %67 = vmatprep.subr.bf16.mxu0 0
  %68 = vmatpush2.bf16.msra.mxu0 0
  %69 = vmatprep.subr.bf16.mxu0 0
  %70 = vmatpush2.bf16.msra.mxu0 0
  %71 = vmatprep.subr.bf16.mxu0 0
  %72 = vmatpush2.bf16.msra.mxu0 0
  %73 = vmatprep.subr.bf16.mxu0 0
  %74 = vmatpush2.bf16.msra.mxu0 0
  %75 = vmatprep.subr.bf16.mxu0 0
  %76 = vmatpush2.bf16.msra.mxu0 0
  %77 = vmatprep.mubr.bf16.mxu0 0
  %78 = vmatmul.mubr.bf16.gmra.mxu0 %v43
  %v79 = vpop.f32.mrf.mxu0
  %v80 = vadd.f32 %v27, %v79
  %v81 = vpop.f32.mrf.mxu0
  %v82 = vpop.f32.mrf.mxu0
  %v83 = vpop.f32.mrf.mxu0
  %84 = vdwg.mxu0
  %v85 = vlaneseq
  %v86 = vand.u32 %v85, 127
  %vm87 = vcmp.lt.s32.totalorder %v86, 4
  %vm88 = vweird.f32 %v80
  %vm89 = vmxor %vm88, 1
  %vm90 = vmand %vm87, %vm89
  %v91 = vsel %vm90, %v80, -3.4028235e+38
  %92 = vst [vmem:[%s3] sm:$0xff] %v91
  %93 = vmax.xlane.f32.xlu0 %v91
  %v94 = vpop.xlane.xlu0 %93
  %v95 = vsub.f32 %v91, %v94
  %v96 = vmul.f32 %v95, 1.442695
  %v97 = vpow.pop %v96
  %v98 = vsel %vm87, %v97, 0.0
  %99 = vadd.xlane.f32.xlu0 %v98
  %v100 = vpop.xlane.xlu0 %99
  %v101 = vlog2.pop %v100
  %v102 = vmul.f32 %v101, 0.6931472
  %v103 = vadd.f32 %v94, %v102
  %vm104 = vcmask 7168
  %105 = vst.msk [vmem:[%s4] sm:$0xff] %vm104, %v103
  // Predicated region
  $region14: #{_base_layer_gate_device.1} parent=0 // pred_check
    _
  $region15: #{_base_layer_gate_device.1} parent=0 // pred_check_branch
    %107 = sbr.rel (0) target = $region17
  $region16: #{_base_layer_gate_device.1} parent=0 // pred_region
    _
  $region17: #{_base_layer_gate_device.1} parent=0 // pred_fallthru
    _
  // Predicated region
  $region18: #{_base_layer_gate_device.1} parent=0 // pred_check
    _
  $region19: #{_base_layer_gate_device.1} parent=0 // pred_check_branch
    %109 = sbr.rel (0) target = $region21
  $region20: #{_base_layer_gate_device.1} parent=0 // pred_region
    _
  $region21: #{_base_layer_gate_device.1} parent=0 // pred_fallthru
    _
  // Predicated region
  $region22: #{_base_layer_gate_device.1} parent=0 // pred_check
    _
  $region23: #{_base_layer_gate_device.1} parent=0 // pred_check_branch
    %111 = sbr.rel (0) target = $region25
  $region24: #{_base_layer_gate_device.1} parent=0 // pred_region
    _
  $region25: #{_base_layer_gate_device.1} parent=0 // pred_fallthru
    _
  // Predicated region
  $region26: #{_base_layer_gate_device.1} parent=0 // pred_check
    _
  $region27: #{_base_layer_gate_device.1} parent=0 // pred_check_branch
    %113 = sbr.rel (0) target = $region29
  $region28: #{_base_layer_gate_device.1} parent=0 // pred_region
    _
  $region29: #{_base_layer_gate_device.1} parent=0 // pred_fallthru
    _

</llo_original>
